<compile_context>
chip_gen: v7x
topology: tpu7x:2x2x1
jax: 0.10.0
libtpu: 0.0.40
codegen_flags: <defaults>
</compile_context>

<pallas_src>
import functools

import jax
import jax.numpy as jnp
import numpy as np
from jax import lax
from jax.experimental import pallas as pl
from jax.experimental.pallas import tpu as pltpu

LANE = 128
_UNROLL_LIMIT = 16  # fully unroll the recurrence for seq_len <= this


def _round_up(n, m):
    return ((n + m - 1) // m) * m


def _lstm_kernel(x_ref, w_ih_t_ref, w_hh_t_ref, b_gates_ref,
                 w_lin_t_ref, b_lin_ref, out_ref, xproj_ref, *, hidden):
    """Single-invocation LSTM + Linear(last hidden).

    Shapes (demo sizes in parens):
      x_ref      (seq_len, ip)        (8, 128)
      w_ih_t_ref (ip, gp)             (128, 128)   gp = round_up(4*hidden, 128)
      w_hh_t_ref (hp, gp)             (32, 128)    hp = round_up(hidden, 8)
      b_gates    (1, gp)
      w_lin_t    (hp, op)             (32, 128)
      b_lin      (1, op)
      out_ref    (1, op)
      xproj_ref  (seq_len, gp) VMEM scratch
    Gate lane layout (torch order): [ i | f | g | o | zero-pad ].
    """
    seq_len = x_ref.shape[0]
    hp, gp = w_hh_t_ref.shape

    # ---- Hoisted input projection: one MXU matmul for the whole sequence,
    #      staged in VMEM scratch (re-read one row per step). --------------
    xproj_ref[...] = (jnp.dot(x_ref[...], w_ih_t_ref[...],
                              preferred_element_type=jnp.float32)
                      + b_gates_ref[...])

    w_hh_t = w_hh_t_ref[...]                            # (hp, gp), loaded once

    # Static lane mask selecting the tanh ('g') gate inside the gate chunk.
    lane = lax.broadcasted_iota(jnp.int32, (1, gp), 1)
    g_mask = (lane >= 2 * hidden) & (lane < 3 * hidden)

    def step(t_slice, h, c):
        # Serial critical path: one tiny MXU matmul per step (K = hidden).
        gates = xproj_ref[t_slice, :] + jnp.dot(
            h, w_hh_t, preferred_element_type=jnp.float32)          # (1, gp)
        # One sigmoid + one tanh over the full lane chunk, lane-select 'g'.
        act = jnp.where(g_mask, jnp.tanh(gates), jax.nn.sigmoid(gates))
        # XLU rolls align f/g/o to lanes [0, hidden); 'i' is already there.
        f_a = pltpu.roll(act, gp - 1 * hidden, axis=1)
        g_a = pltpu.roll(act, gp - 2 * hidden, axis=1)
        o_a = pltpu.roll(act, gp - 3 * hidden, axis=1)
        # Only lanes [0, hidden) are meaningful; other lanes carry bounded
        # garbage that is multiplied by zero weight rows downstream.
        c = f_a * c + act * g_a
        h = (o_a * jnp.tanh(c))[:, :hp]                 # (1, hp) for next step
        return h, c

    h = jnp.zeros((1, hp), jnp.float32)
    c = jnp.zeros((1, gp), jnp.float32)

    if seq_len <= _UNROLL_LIMIT:
        # Full unroll: gives the LLO scheduler cross-iteration visibility.
        for t in range(seq_len):
            h, c = step(pl.ds(t, 1), h, c)
    else:
        # Long sequences: bounded live ranges, partial unroll.
        def body(t, carry):
            h, c = carry
            return step(pl.ds(t, 1), h, c)
        h, c = lax.fori_loop(0, seq_len, body, (h, c), unroll=4)

    # predictions[-1] = Linear(h_last); lane-dense (padded) output store.
    out_ref[...] = (jnp.dot(h, w_lin_t_ref[...],
                            preferred_element_type=jnp.float32)
                    + b_lin_ref[...]).astype(out_ref.dtype)


# --------------------------------------------------------------------------
# One-time parameter preparation (hoisted out of the per-call forward path).
# --------------------------------------------------------------------------
def prepare_params(params):
    """Pad / transpose / fuse the torch-layout parameters once.

    Returns (arrays, (hidden, out_size)) to be passed to
    lstm_timeseries_forward.
    """
    w_ih, w_hh, b_ih, b_hh, w_lin, b_lin = params
    f32 = jnp.float32
    hidden = w_hh.shape[1]
    input_size = w_ih.shape[1]
    out_size = w_lin.shape[0]

    gp = _round_up(4 * hidden, LANE)   # gate lane width (== 4*hidden if h=32)
    hp = _round_up(hidden, 8)          # sublane-aligned hidden (matmul K)
    ip = _round_up(input_size, LANE)   # K of hoisted input projection
    op = _round_up(out_size, LANE)     # lane-dense output width

    def gates_to_lanes(w, rows_to):
        # (4H, K) -> (K, 4H) -> zero-pad rows to rows_to, lanes to gp.
        wt = jnp.asarray(w, f32).T
        return jnp.pad(wt, ((0, rows_to - wt.shape[0]), (0, gp - 4 * hidden)))

    w_ih_t = gates_to_lanes(w_ih, ip)          # (ip, gp)
    w_hh_t = gates_to_lanes(w_hh, hp)          # (hp, gp)
    b_g = jnp.pad(jnp.asarray(b_ih, f32) + jnp.asarray(b_hh, f32),
                  (0, gp - 4 * hidden)).reshape(1, gp)
    w_lin_t = jnp.pad(jnp.asarray(w_lin, f32).T,
                      ((0, hp - hidden), (0, op - out_size)))       # (hp, op)
    b_lin_p = jnp.pad(jnp.asarray(b_lin, f32), (0, op - out_size)).reshape(1, op)

    arrays = (w_ih_t, w_hh_t, b_g, w_lin_t, b_lin_p)
    return arrays, (int(hidden), int(out_size))


@functools.partial(jax.jit, static_argnames=("hidden", "out_size"))
def _forward_jit(x, w_ih_t, w_hh_t, b_g, w_lin_t, b_lin_p, *, hidden, out_size):
    seq_len, input_size = x.shape
    ip, gp = w_ih_t.shape
    op = w_lin_t.shape[1]

    # Pad the feature dim only; the sequence (recurrence) length stays exact.
    x_p = jnp.pad(x.astype(jnp.float32), ((0, 0), (0, ip - input_size)))

    vmem = pl.BlockSpec(memory_space=pltpu.MemorySpace.VMEM)
    out = pl.pallas_call(
        functools.partial(_lstm_kernel, hidden=hidden),
        out_shape=jax.ShapeDtypeStruct((1, op), jnp.float32),
        in_specs=[vmem] * 6,
        out_specs=vmem,
        scratch_shapes=[pltpu.VMEM((seq_len, gp), jnp.float32)],
    )(x_p, w_ih_t, w_hh_t, b_g, w_lin_t, b_lin_p)
    return out[0, :out_size]


def lstm_timeseries_forward(x, prepared):
    """x: [seq_len, input_size] f32. Returns [output_size] (== predictions[-1])."""
    arrays, (hidden, out_size) = prepared
    return _forward_jit(x, *arrays, hidden=hidden, out_size=out_size)


# --------------------------------------------------------------------------
# Pure-JAX reference (torch.nn.LSTM + Linear semantics) and parameter init.
# --------------------------------------------------------------------------
def _reference_forward(x, params):
    w_ih, w_hh, b_ih, b_hh, w_lin, b_lin = params
    hidden = w_hh.shape[1]

    def step(carry, x_t):
        h, c = carry
        gates = x_t @ w_ih.T + h @ w_hh.T + b_ih + b_hh
        i = jax.nn.sigmoid(gates[0 * hidden:1 * hidden])
        f = jax.nn.sigmoid(gates[1 * hidden:2 * hidden])
        g = jnp.tanh(gates[2 * hidden:3 * hidden])
        o = jax.nn.sigmoid(gates[3 * hidden:4 * hidden])
        c = f * c + i * g
        h = o * jnp.tanh(c)
        return (h, c), h

    h0 = jnp.zeros((hidden,), jnp.float32)
    (h_last, _), _ = lax.scan(step, (h0, h0), x)
    return h_last @ w_lin.T + b_lin


def init_params(key, input_size, hidden, output_size):
    # torch default init: U(-1/sqrt(H), 1/sqrt(H)) for LSTM and Linear params.
    ks = jax.random.split(key, 6)
    s = 1.0 / np.sqrt(hidden)
    w_ih = jax.random.uniform(ks[0], (4 * hidden, input_size), jnp.float32, -s, s)
    w_hh = jax.random.uniform(ks[1], (4 * hidden, hidden), jnp.float32, -s, s)
    b_ih = jax.random.uniform(ks[2], (4 * hidden,), jnp.float32, -s, s)
    b_hh = jax.random.uniform(ks[3], (4 * hidden,), jnp.float32, -s, s)
    w_lin = jax.random.uniform(ks[4], (output_size, hidden), jnp.float32, -s, s)
    b_lin = jax.random.uniform(ks[5], (output_size,), jnp.float32, -s, s)
    return (w_ih, w_hh, b_ih, b_hh, w_lin, b_lin)


if __name__ == "__main__":
    seq_len, input_size, hidden, output_size = 8, 4, 32, 1

    key = jax.random.PRNGKey(0)
    k_x, k_p = jax.random.split(key)
    x = jax.random.normal(k_x, (seq_len, input_size), jnp.float32)
    params = init_params(k_p, input_size, hidden, output_size)

    prepared = prepare_params(params)            # one-time pad/transpose/fuse
    out = jax.block_until_ready(lstm_timeseries_forward(x, prepared))
    ref = jax.block_until_ready(_reference_forward(x, params))

    assert out.shape == (output_size,)
    np.testing.assert_allclose(np.asarray(out), np.asarray(ref),
                               rtol=1e-5, atol=1e-5)
    print("KERNEL_OK")
</pallas_src>

<mosaic_0001>
module attributes {stable_mosaic.version = 11 : i64} {
  func.func @_lstm_kernel(%arg0: memref<8x128xf32, #tpu.memory_space<vmem>>, %arg1: memref<128x128xf32, #tpu.memory_space<vmem>>, %arg2: memref<32x128xf32, #tpu.memory_space<vmem>>, %arg3: memref<1x128xf32, #tpu.memory_space<vmem>>, %arg4: memref<32x128xf32, #tpu.memory_space<vmem>>, %arg5: memref<1x128xf32, #tpu.memory_space<vmem>>, %arg6: memref<1x128xf32, #tpu.memory_space<vmem>>, %arg7: memref<8x128xf32, #tpu.memory_space<vmem>>) attributes {dimension_semantics = [], scalar_prefetch = 0 : i64, scratch_operands = 1 : i64, tpu.core_type = #tpu.core_type<tc>} {
    %c0 = arith.constant 0 : index
    %c0_0 = arith.constant 0 : index
    %0 = vector.load %arg0[%c0, %c0_0] : memref<8x128xf32, #tpu.memory_space<vmem>>, vector<8x128xf32>
    %c0_1 = arith.constant 0 : index
    %c0_2 = arith.constant 0 : index
    %1 = vector.load %arg1[%c0_1, %c0_2] : memref<128x128xf32, #tpu.memory_space<vmem>>, vector<128x128xf32>
    %cst = arith.constant dense<0.000000e+00> : vector<8x128xf32>
    %2 = tpu.matmul %0, %1, %cst {dimension_numbers = #tpu.dot_dimension_numbers<[1], [0], [0], [1], [0, 0, 1, 1], [], []>} : vector<8x128xf32>, vector<128x128xf32>, vector<8x128xf32> -> vector<8x128xf32>
    %c0_3 = arith.constant 0 : index
    %c0_4 = arith.constant 0 : index
    %3 = vector.load %arg3[%c0_3, %c0_4] : memref<1x128xf32, #tpu.memory_space<vmem>>, vector<1x128xf32>
    %4 = vector.broadcast %3 : vector<1x128xf32> to vector<8x128xf32>
    %5 = arith.addf %2, %4 : vector<8x128xf32>
    %c0_5 = arith.constant 0 : index
    %c0_6 = arith.constant 0 : index
    %6 = vector.load %arg7[%c0_5, %c0_6] : memref<8x128xf32, #tpu.memory_space<vmem>>, vector<8x128xf32>
    tpu.vector_store %arg7[%c0_5, %c0_6], %5 {strides = array<i32>} : memref<8x128xf32, #tpu.memory_space<vmem>>, vector<8x128xf32>,
    %c0_7 = arith.constant 0 : index
    %c0_8 = arith.constant 0 : index
    %7 = vector.load %arg2[%c0_7, %c0_8] : memref<32x128xf32, #tpu.memory_space<vmem>>, vector<32x128xf32>
    %8 = tpu.iota {dimensions = array<i32: 1>} : vector<1x128xi32>
    %c64_i32 = arith.constant 64 : i32
    %9 = vector.broadcast %c64_i32 : i32 to vector<1x128xi32>
    %10 = arith.cmpi sge, %8, %9 : vector<1x128xi32>
    %c96_i32 = arith.constant 96 : i32
    %11 = vector.broadcast %c96_i32 : i32 to vector<1x128xi32>
    %12 = arith.cmpi slt, %8, %11 : vector<1x128xi32>
    %13 = arith.andi %10, %12 : vector<1x128xi1>
    %cst_9 = arith.constant 0.000000e+00 : f32
    %14 = vector.broadcast %cst_9 : f32 to vector<1x32xf32>
    %cst_10 = arith.constant 0.000000e+00 : f32
    %15 = vector.broadcast %cst_10 : f32 to vector<1x128xf32>
    %c0_11 = arith.constant 0 : index
    %c0_12 = arith.constant 0 : index
    %16 = vector.load %arg7[%c0_11, %c0_12] : memref<8x128xf32, #tpu.memory_space<vmem>>, vector<1x128xf32>
    %cst_13 = arith.constant dense<0.000000e+00> : vector<1x128xf32>
    %17 = tpu.matmul %14, %7, %cst_13 {dimension_numbers = #tpu.dot_dimension_numbers<[1], [0], [0], [1], [0, 0, 1, 1], [], []>} : vector<1x32xf32>, vector<32x128xf32>, vector<1x128xf32> -> vector<1x128xf32>
    %18 = arith.addf %16, %17 : vector<1x128xf32>
    %19 = math.tanh %18 : vector<1x128xf32>
    %20 = arith.negf %18 : vector<1x128xf32>
    %21 = math.exp %20 : vector<1x128xf32>
    %cst_14 = arith.constant 1.000000e+00 : f32
    %22 = vector.broadcast %cst_14 : f32 to vector<1x128xf32>
    %23 = arith.addf %22, %21 : vector<1x128xf32>
    %24 = arith.divf %22, %23 : vector<1x128xf32>
    %25 = arith.select %13, %19, %24 : vector<1x128xi1>, vector<1x128xf32>
    %c96_i32_15 = arith.constant 96 : i32
    %26 = tpu.dynamic_rotate %25 by %c96_i32_15 dim 1 : vector<1x128xf32>, i32 -> vector<1x128xf32>
    %c64_i32_16 = arith.constant 64 : i32
    %27 = tpu.dynamic_rotate %25 by %c64_i32_16 dim 1 : vector<1x128xf32>, i32 -> vector<1x128xf32>
    %c32_i32 = arith.constant 32 : i32
    %28 = tpu.dynamic_rotate %25 by %c32_i32 dim 1 : vector<1x128xf32>, i32 -> vector<1x128xf32>
    %29 = arith.mulf %26, %15 : vector<1x128xf32>
    %30 = arith.mulf %25, %27 : vector<1x128xf32>
    %31 = arith.addf %29, %30 : vector<1x128xf32>
    %32 = math.tanh %31 : vector<1x128xf32>
    %33 = arith.mulf %28, %32 : vector<1x128xf32>
    %34 = vector.extract_strided_slice %33 {offsets = [0, 0], sizes = [1, 32], strides = [1, 1]} : vector<1x128xf32> to vector<1x32xf32>
    %c1 = arith.constant 1 : index
    %c0_17 = arith.constant 0 : index
    %35 = vector.load %arg7[%c1, %c0_17] : memref<8x128xf32, #tpu.memory_space<vmem>>, vector<1x128xf32>
    %cst_18 = arith.constant dense<0.000000e+00> : vector<1x128xf32>
    %36 = tpu.matmul %34, %7, %cst_18 {dimension_numbers = #tpu.dot_dimension_numbers<[1], [0], [0], [1], [0, 0, 1, 1], [], []>} : vector<1x32xf32>, vector<32x128xf32>, vector<1x128xf32> -> vector<1x128xf32>
    %37 = arith.addf %35, %36 : vector<1x128xf32>
    %38 = math.tanh %37 : vector<1x128xf32>
    %39 = arith.negf %37 : vector<1x128xf32>
    %40 = math.exp %39 : vector<1x128xf32>
    %cst_19 = arith.constant 1.000000e+00 : f32
    %41 = vector.broadcast %cst_19 : f32 to vector<1x128xf32>
    %42 = arith.addf %41, %40 : vector<1x128xf32>
    %43 = arith.divf %41, %42 : vector<1x128xf32>
    %44 = arith.select %13, %38, %43 : vector<1x128xi1>, vector<1x128xf32>
    %c96_i32_20 = arith.constant 96 : i32
    %45 = tpu.dynamic_rotate %44 by %c96_i32_20 dim 1 : vector<1x128xf32>, i32 -> vector<1x128xf32>
    %c64_i32_21 = arith.constant 64 : i32
    %46 = tpu.dynamic_rotate %44 by %c64_i32_21 dim 1 : vector<1x128xf32>, i32 -> vector<1x128xf32>
    %c32_i32_22 = arith.constant 32 : i32
    %47 = tpu.dynamic_rotate %44 by %c32_i32_22 dim 1 : vector<1x128xf32>, i32 -> vector<1x128xf32>
    %48 = arith.mulf %45, %31 : vector<1x128xf32>
    %49 = arith.mulf %44, %46 : vector<1x128xf32>
    %50 = arith.addf %48, %49 : vector<1x128xf32>
    %51 = math.tanh %50 : vector<1x128xf32>
    %52 = arith.mulf %47, %51 : vector<1x128xf32>
    %53 = vector.extract_strided_slice %52 {offsets = [0, 0], sizes = [1, 32], strides = [1, 1]} : vector<1x128xf32> to vector<1x32xf32>
    %c2 = arith.constant 2 : index
    %c0_23 = arith.constant 0 : index
    %54 = vector.load %arg7[%c2, %c0_23] : memref<8x128xf32, #tpu.memory_space<vmem>>, vector<1x128xf32>
    %cst_24 = arith.constant dense<0.000000e+00> : vector<1x128xf32>
    %55 = tpu.matmul %53, %7, %cst_24 {dimension_numbers = #tpu.dot_dimension_numbers<[1], [0], [0], [1], [0, 0, 1, 1], [], []>} : vector<1x32xf32>, vector<32x128xf32>, vector<1x128xf32> -> vector<1x128xf32>
    %56 = arith.addf %54, %55 : vector<1x128xf32>
    %57 = math.tanh %56 : vector<1x128xf32>
    %58 = arith.negf %56 : vector<1x128xf32>
    %59 = math.exp %58 : vector<1x128xf32>
    %cst_25 = arith.constant 1.000000e+00 : f32
    %60 = vector.broadcast %cst_25 : f32 to vector<1x128xf32>
    %61 = arith.addf %60, %59 : vector<1x128xf32>
    %62 = arith.divf %60, %61 : vector<1x128xf32>
    %63 = arith.select %13, %57, %62 : vector<1x128xi1>, vector<1x128xf32>
    %c96_i32_26 = arith.constant 96 : i32
    %64 = tpu.dynamic_rotate %63 by %c96_i32_26 dim 1 : vector<1x128xf32>, i32 -> vector<1x128xf32>
    %c64_i32_27 = arith.constant 64 : i32
    %65 = tpu.dynamic_rotate %63 by %c64_i32_27 dim 1 : vector<1x128xf32>, i32 -> vector<1x128xf32>
    %c32_i32_28 = arith.constant 32 : i32
    %66 = tpu.dynamic_rotate %63 by %c32_i32_28 dim 1 : vector<1x128xf32>, i32 -> vector<1x128xf32>
    %67 = arith.mulf %64, %50 : vector<1x128xf32>
    %68 = arith.mulf %63, %65 : vector<1x128xf32>
    %69 = arith.addf %67, %68 : vector<1x128xf32>
    %70 = math.tanh %69 : vector<1x128xf32>
    %71 = arith.mulf %66, %70 : vector<1x128xf32>
    %72 = vector.extract_strided_slice %71 {offsets = [0, 0], sizes = [1, 32], strides = [1, 1]} : vector<1x128xf32> to vector<1x32xf32>
    %c3 = arith.constant 3 : index
    %c0_29 = arith.constant 0 : index
    %73 = vector.load %arg7[%c3, %c0_29] : memref<8x128xf32, #tpu.memory_space<vmem>>, vector<1x128xf32>
    %cst_30 = arith.constant dense<0.000000e+00> : vector<1x128xf32>
    %74 = tpu.matmul %72, %7, %cst_30 {dimension_numbers = #tpu.dot_dimension_numbers<[1], [0], [0], [1], [0, 0, 1, 1], [], []>} : vector<1x32xf32>, vector<32x128xf32>, vector<1x128xf32> -> vector<1x128xf32>
    %75 = arith.addf %73, %74 : vector<1x128xf32>
    %76 = math.tanh %75 : vector<1x128xf32>
    %77 = arith.negf %75 : vector<1x128xf32>
    %78 = math.exp %77 : vector<1x128xf32>
    %cst_31 = arith.constant 1.000000e+00 : f32
    %79 = vector.broadcast %cst_31 : f32 to vector<1x128xf32>
    %80 = arith.addf %79, %78 : vector<1x128xf32>
    %81 = arith.divf %79, %80 : vector<1x128xf32>
    %82 = arith.select %13, %76, %81 : vector<1x128xi1>, vector<1x128xf32>
    %c96_i32_32 = arith.constant 96 : i32
    %83 = tpu.dynamic_rotate %82 by %c96_i32_32 dim 1 : vector<1x128xf32>, i32 -> vector<1x128xf32>
    %c64_i32_33 = arith.constant 64 : i32
    %84 = tpu.dynamic_rotate %82 by %c64_i32_33 dim 1 : vector<1x128xf32>, i32 -> vector<1x128xf32>
    %c32_i32_34 = arith.constant 32 : i32
    %85 = tpu.dynamic_rotate %82 by %c32_i32_34 dim 1 : vector<1x128xf32>, i32 -> vector<1x128xf32>
    %86 = arith.mulf %83, %69 : vector<1x128xf32>
    %87 = arith.mulf %82, %84 : vector<1x128xf32>
    %88 = arith.addf %86, %87 : vector<1x128xf32>
    %89 = math.tanh %88 : vector<1x128xf32>
    %90 = arith.mulf %85, %89 : vector<1x128xf32>
    %91 = vector.extract_strided_slice %90 {offsets = [0, 0], sizes = [1, 32], strides = [1, 1]} : vector<1x128xf32> to vector<1x32xf32>
    %c4 = arith.constant 4 : index
    %c0_35 = arith.constant 0 : index
    %92 = vector.load %arg7[%c4, %c0_35] : memref<8x128xf32, #tpu.memory_space<vmem>>, vector<1x128xf32>
    %cst_36 = arith.constant dense<0.000000e+00> : vector<1x128xf32>
    %93 = tpu.matmul %91, %7, %cst_36 {dimension_numbers = #tpu.dot_dimension_numbers<[1], [0], [0], [1], [0, 0, 1, 1], [], []>} : vector<1x32xf32>, vector<32x128xf32>, vector<1x128xf32> -> vector<1x128xf32>
    %94 = arith.addf %92, %93 : vector<1x128xf32>
    %95 = math.tanh %94 : vector<1x128xf32>
    %96 = arith.negf %94 : vector<1x128xf32>
    %97 = math.exp %96 : vector<1x128xf32>
    %cst_37 = arith.constant 1.000000e+00 : f32
    %98 = vector.broadcast %cst_37 : f32 to vector<1x128xf32>
    %99 = arith.addf %98, %97 : vector<1x128xf32>
    %100 = arith.divf %98, %99 : vector<1x128xf32>
    %101 = arith.select %13, %95, %100 : vector<1x128xi1>, vector<1x128xf32>
    %c96_i32_38 = arith.constant 96 : i32
    %102 = tpu.dynamic_rotate %101 by %c96_i32_38 dim 1 : vector<1x128xf32>, i32 -> vector<1x128xf32>
    %c64_i32_39 = arith.constant 64 : i32
    %103 = tpu.dynamic_rotate %101 by %c64_i32_39 dim 1 : vector<1x128xf32>, i32 -> vector<1x128xf32>
    %c32_i32_40 = arith.constant 32 : i32
    %104 = tpu.dynamic_rotate %101 by %c32_i32_40 dim 1 : vector<1x128xf32>, i32 -> vector<1x128xf32>
    %105 = arith.mulf %102, %88 : vector<1x128xf32>
    %106 = arith.mulf %101, %103 : vector<1x128xf32>
    %107 = arith.addf %105, %106 : vector<1x128xf32>
    %108 = math.tanh %107 : vector<1x128xf32>
    %109 = arith.mulf %104, %108 : vector<1x128xf32>
    %110 = vector.extract_strided_slice %109 {offsets = [0, 0], sizes = [1, 32], strides = [1, 1]} : vector<1x128xf32> to vector<1x32xf32>
    %c5 = arith.constant 5 : index
    %c0_41 = arith.constant 0 : index
    %111 = vector.load %arg7[%c5, %c0_41] : memref<8x128xf32, #tpu.memory_space<vmem>>, vector<1x128xf32>
    %cst_42 = arith.constant dense<0.000000e+00> : vector<1x128xf32>
    %112 = tpu.matmul %110, %7, %cst_42 {dimension_numbers = #tpu.dot_dimension_numbers<[1], [0], [0], [1], [0, 0, 1, 1], [], []>} : vector<1x32xf32>, vector<32x128xf32>, vector<1x128xf32> -> vector<1x128xf32>
    %113 = arith.addf %111, %112 : vector<1x128xf32>
    %114 = math.tanh %113 : vector<1x128xf32>
    %115 = arith.negf %113 : vector<1x128xf32>
    %116 = math.exp %115 : vector<1x128xf32>
    %cst_43 = arith.constant 1.000000e+00 : f32
    %117 = vector.broadcast %cst_43 : f32 to vector<1x128xf32>
    %118 = arith.addf %117, %116 : vector<1x128xf32>
    %119 = arith.divf %117, %118 : vector<1x128xf32>
    %120 = arith.select %13, %114, %119 : vector<1x128xi1>, vector<1x128xf32>
    %c96_i32_44 = arith.constant 96 : i32
    %121 = tpu.dynamic_rotate %120 by %c96_i32_44 dim 1 : vector<1x128xf32>, i32 -> vector<1x128xf32>
    %c64_i32_45 = arith.constant 64 : i32
    %122 = tpu.dynamic_rotate %120 by %c64_i32_45 dim 1 : vector<1x128xf32>, i32 -> vector<1x128xf32>
    %c32_i32_46 = arith.constant 32 : i32
    %123 = tpu.dynamic_rotate %120 by %c32_i32_46 dim 1 : vector<1x128xf32>, i32 -> vector<1x128xf32>
    %124 = arith.mulf %121, %107 : vector<1x128xf32>
    %125 = arith.mulf %120, %122 : vector<1x128xf32>
    %126 = arith.addf %124, %125 : vector<1x128xf32>
    %127 = math.tanh %126 : vector<1x128xf32>
    %128 = arith.mulf %123, %127 : vector<1x128xf32>
    %129 = vector.extract_strided_slice %128 {offsets = [0, 0], sizes = [1, 32], strides = [1, 1]} : vector<1x128xf32> to vector<1x32xf32>
    %c6 = arith.constant 6 : index
    %c0_47 = arith.constant 0 : index
    %130 = vector.load %arg7[%c6, %c0_47] : memref<8x128xf32, #tpu.memory_space<vmem>>, vector<1x128xf32>
    %cst_48 = arith.constant dense<0.000000e+00> : vector<1x128xf32>
    %131 = tpu.matmul %129, %7, %cst_48 {dimension_numbers = #tpu.dot_dimension_numbers<[1], [0], [0], [1], [0, 0, 1, 1], [], []>} : vector<1x32xf32>, vector<32x128xf32>, vector<1x128xf32> -> vector<1x128xf32>
    %132 = arith.addf %130, %131 : vector<1x128xf32>
    %133 = math.tanh %132 : vector<1x128xf32>
    %134 = arith.negf %132 : vector<1x128xf32>
    %135 = math.exp %134 : vector<1x128xf32>
    %cst_49 = arith.constant 1.000000e+00 : f32
    %136 = vector.broadcast %cst_49 : f32 to vector<1x128xf32>
    %137 = arith.addf %136, %135 : vector<1x128xf32>
    %138 = arith.divf %136, %137 : vector<1x128xf32>
    %139 = arith.select %13, %133, %138 : vector<1x128xi1>, vector<1x128xf32>
    %c96_i32_50 = arith.constant 96 : i32
    %140 = tpu.dynamic_rotate %139 by %c96_i32_50 dim 1 : vector<1x128xf32>, i32 -> vector<1x128xf32>
    %c64_i32_51 = arith.constant 64 : i32
    %141 = tpu.dynamic_rotate %139 by %c64_i32_51 dim 1 : vector<1x128xf32>, i32 -> vector<1x128xf32>
    %c32_i32_52 = arith.constant 32 : i32
    %142 = tpu.dynamic_rotate %139 by %c32_i32_52 dim 1 : vector<1x128xf32>, i32 -> vector<1x128xf32>
    %143 = arith.mulf %140, %126 : vector<1x128xf32>
    %144 = arith.mulf %139, %141 : vector<1x128xf32>
    %145 = arith.addf %143, %144 : vector<1x128xf32>
    %146 = math.tanh %145 : vector<1x128xf32>
    %147 = arith.mulf %142, %146 : vector<1x128xf32>
    %148 = vector.extract_strided_slice %147 {offsets = [0, 0], sizes = [1, 32], strides = [1, 1]} : vector<1x128xf32> to vector<1x32xf32>
    %c7 = arith.constant 7 : index
    %c0_53 = arith.constant 0 : index
    %149 = vector.load %arg7[%c7, %c0_53] : memref<8x128xf32, #tpu.memory_space<vmem>>, vector<1x128xf32>
    %cst_54 = arith.constant dense<0.000000e+00> : vector<1x128xf32>
    %150 = tpu.matmul %148, %7, %cst_54 {dimension_numbers = #tpu.dot_dimension_numbers<[1], [0], [0], [1], [0, 0, 1, 1], [], []>} : vector<1x32xf32>, vector<32x128xf32>, vector<1x128xf32> -> vector<1x128xf32>
    %151 = arith.addf %149, %150 : vector<1x128xf32>
    %152 = math.tanh %151 : vector<1x128xf32>
    %153 = arith.negf %151 : vector<1x128xf32>
    %154 = math.exp %153 : vector<1x128xf32>
    %cst_55 = arith.constant 1.000000e+00 : f32
    %155 = vector.broadcast %cst_55 : f32 to vector<1x128xf32>
    %156 = arith.addf %155, %154 : vector<1x128xf32>
    %157 = arith.divf %155, %156 : vector<1x128xf32>
    %158 = arith.select %13, %152, %157 : vector<1x128xi1>, vector<1x128xf32>
    %c96_i32_56 = arith.constant 96 : i32
    %159 = tpu.dynamic_rotate %158 by %c96_i32_56 dim 1 : vector<1x128xf32>, i32 -> vector<1x128xf32>
    %c64_i32_57 = arith.constant 64 : i32
    %160 = tpu.dynamic_rotate %158 by %c64_i32_57 dim 1 : vector<1x128xf32>, i32 -> vector<1x128xf32>
    %c32_i32_58 = arith.constant 32 : i32
    %161 = tpu.dynamic_rotate %158 by %c32_i32_58 dim 1 : vector<1x128xf32>, i32 -> vector<1x128xf32>
    %162 = arith.mulf %159, %145 : vector<1x128xf32>
    %163 = arith.mulf %158, %160 : vector<1x128xf32>
    %164 = arith.addf %162, %163 : vector<1x128xf32>
    %165 = math.tanh %164 : vector<1x128xf32>
    %166 = arith.mulf %161, %165 : vector<1x128xf32>
    %167 = vector.extract_strided_slice %166 {offsets = [0, 0], sizes = [1, 32], strides = [1, 1]} : vector<1x128xf32> to vector<1x32xf32>
    %c0_59 = arith.constant 0 : index
    %c0_60 = arith.constant 0 : index
    %168 = vector.load %arg4[%c0_59, %c0_60] : memref<32x128xf32, #tpu.memory_space<vmem>>, vector<32x128xf32>
    %cst_61 = arith.constant dense<0.000000e+00> : vector<1x128xf32>
    %169 = tpu.matmul %167, %168, %cst_61 {dimension_numbers = #tpu.dot_dimension_numbers<[1], [0], [0], [1], [0, 0, 1, 1], [], []>} : vector<1x32xf32>, vector<32x128xf32>, vector<1x128xf32> -> vector<1x128xf32>
    %c0_62 = arith.constant 0 : index
    %c0_63 = arith.constant 0 : index
    %170 = vector.load %arg5[%c0_62, %c0_63] : memref<1x128xf32, #tpu.memory_space<vmem>>, vector<1x128xf32>
    %171 = arith.addf %169, %170 : vector<1x128xf32>
    %c0_64 = arith.constant 0 : index
    %c0_65 = arith.constant 0 : index
    %172 = vector.load %arg6[%c0_64, %c0_65] : memref<1x128xf32, #tpu.memory_space<vmem>>, vector<1x128xf32>
    tpu.vector_store %arg6[%c0_64, %c0_65], %171 {strides = array<i32>} : memref<1x128xf32, #tpu.memory_space<vmem>>, vector<1x128xf32>,
    return
  }
}

</mosaic_0001>

<llo_original>
// kernel: _forward_jit.1
$region0: #{_forward_jit.1}
  #allocation0 [shape = 'u32[]', space=smem, size = 0x4, offset = 0x4, fixed_abs, tag = 'smem constant byte address 0x4 - core index']
  #allocation1 [shape = 'u32[144,128]{1,0:T(1,128)}', space=vmem, size = 0x12000, scoped, tag = 'internal scratch']
  #allocation2 [shape = 'f32[8,128]{1,0:T(8,128)}', space=vmem, size = 0x1000, scoped, tag = 'scratch operand']
  %s0 = inlined_call_operand.vmem [shape: f32[8,128], index: 0, kind: input, shape index: {}]
  %s1 = inlined_call_operand.hbm [shape: f32[128,128], index: 1, kind: input, shape index: {}]
  %s2 = inlined_call_operand.vmem [shape: f32[32,128], index: 2, kind: input, shape index: {}]
  %s3 = inlined_call_operand.vmem [shape: f32[1,128], index: 3, kind: input, shape index: {}]
  %s4 = inlined_call_operand.hbm [shape: f32[32,128], index: 4, kind: input, shape index: {}]
  %s5 = inlined_call_operand.vmem [shape: f32[1,128], index: 5, kind: input, shape index: {}]
  %s6 = inlined_call_operand.hbm [shape: f32[1,128], index: 6, kind: output, shape index: {}]
  %s7 = sld [smem:[#allocation0]]
  $region42: #{_forward_jit.1} parent=0
    _
  %s9 = ssub.s32 1, %s7
  %s10 = scalar_select 0, %s9, %s7
  $region1: #{_forward_jit.1} parent=0
    #allocation3 [shape = 'u8[65536]{0}', space=vmem, size = 0x10000, scoped, tag = 'input window, operand 1, single buffered']
    #allocation4 [shape = 's32[1]{0}', space=sflag, size = 0x4, scoped, tag = 'scoped memory for _forward_jit.1']
    #allocation5 [shape = 's32[1]{0}', space=sflag, size = 0x4, scoped, tag = 'scoped memory for _forward_jit.1']
    #allocation6 [shape = 'u8[16384]{0}', space=vmem, size = 0x4000, scoped, tag = 'input window, operand 4, single buffered']
    #allocation7 [shape = 's32[1]{0}', space=sflag, size = 0x4, scoped, tag = 'scoped memory for _forward_jit.1']
    #allocation8 [shape = 'u8[512]{0}', space=vmem, size = 0x400, scoped, tag = 'output window, operand 0, single buffered']
    %11 = vsyncpa [#allocation4], 0
    %12 = vsyncpa [#allocation7], 0
    %13 = vsyncpa [#allocation5], 0
    // Predicated region
    $region2: #{_forward_jit.1} parent=1 // pred_check
      _
    $region3: #{_forward_jit.1} parent=1 // pred_check_branch
      %15 = sbr.rel (0) target = $region5
    $region4: #{_forward_jit.1} parent=1 // pred_region
      _
    $region5: #{_forward_jit.1} parent=1 // pred_fallthru
      _
    // Predicated region
    $region6: #{_forward_jit.1} parent=1 // pred_check
      _
    $region7: #{_forward_jit.1} parent=1 // pred_check_branch
      %17 = sbr.rel (0) target = $region9
    $region8: #{_forward_jit.1} parent=1 // pred_region
      %s19 = ssub.s32 2048, 2048
      %20 = vsyncadd [#allocation4], %s19
      %s21 = sshll.u32 [#allocation3], 4
      %s22 = int_to_ptr.vmem [resolvable:$true] %s21
      %27 = dma.hbm_to_vmem [thread:$0]  %s1, 2048, %s22, [#allocation4], 128, 128, 8
    $region9: #{_forward_jit.1} parent=1 // pred_fallthru
      _
    // Predicated region
    $region10: #{_forward_jit.1} parent=1 // pred_check
      _
    $region11: #{_forward_jit.1} parent=1 // pred_check_branch
      %29 = sbr.rel (0) target = $region13
    $region12: #{_forward_jit.1} parent=1 // pred_region
      _
    $region13: #{_forward_jit.1} parent=1 // pred_fallthru
      _
    // Predicated region
    $region14: #{_forward_jit.1} parent=1 // pred_check
      _
    $region15: #{_forward_jit.1} parent=1 // pred_check_branch
      %31 = sbr.rel (0) target = $region17
    $region16: #{_forward_jit.1} parent=1 // pred_region
      _
    $region17: #{_forward_jit.1} parent=1 // pred_fallthru
      _
    // Predicated region
    $region18: #{_forward_jit.1} parent=1 // pred_check
      _
    $region19: #{_forward_jit.1} parent=1 // pred_check_branch
      %33 = sbr.rel (0) target = $region21
    $region20: #{_forward_jit.1} parent=1 // pred_region
      %s35 = ssub.s32 512, 512
      %36 = vsyncadd [#allocation7], %s35
      %s37 = sshll.u32 [#allocation6], 4
      %s38 = int_to_ptr.vmem [resolvable:$true] %s37
      %43 = dma.hbm_to_vmem [thread:$0]  %s4, 512, %s38, [#allocation7], 128, 128, 8
    $region21: #{_forward_jit.1} parent=1 // pred_fallthru
      _
    // Predicated region
    $region22: #{_forward_jit.1} parent=1 // pred_check
      _
    $region23: #{_forward_jit.1} parent=1 // pred_check_branch
      %45 = sbr.rel (0) target = $region25
    $region24: #{_forward_jit.1} parent=1 // pred_region
      _
    $region25: #{_forward_jit.1} parent=1 // pred_fallthru
      _
    // Predicated region
    $region26: #{_forward_jit.1} parent=1 // pred_check
      _
    $region27: #{_forward_jit.1} parent=1 // pred_check_branch
      %47 = sbr.rel (0) target = $region29
    $region28: #{_forward_jit.1} parent=1 // pred_region
      %48 = dma.done [#allocation4], 2048
    $region29: #{_forward_jit.1} parent=1 // pred_fallthru
      _
    // Predicated region
    $region30: #{_forward_jit.1} parent=1 // pred_check
      _
    $region31: #{_forward_jit.1} parent=1 // pred_check_branch
      %50 = sbr.rel (0) target = $region33
    $region32: #{_forward_jit.1} parent=1 // pred_region
      %51 = dma.done [#allocation7], 512
    $region33: #{_forward_jit.1} parent=1 // pred_fallthru
      _
    %v52 = vld [vmem:[%s0] sm:$0xff]
    %v53 = vld [vmem:[#allocation3] sm:$0xff]
    %v54 = vld [vmem:[#allocation3 + $0x8] sm:$0xff]
    %v55 = vld [vmem:[#allocation3 + $0x10] sm:$0xff]
    %v56 = vld [vmem:[#allocation3 + $0x18] sm:$0xff]
    %v57 = vld [vmem:[#allocation3 + $0x20] sm:$0xff]
    %v58 = vld [vmem:[#allocation3 + $0x28] sm:$0xff]
    %v59 = vld [vmem:[#allocation3 + $0x30] sm:$0xff]
    %v60 = vld [vmem:[#allocation3 + $0x38] sm:$0xff]
    %v61 = vld [vmem:[#allocation3 + $0x40] sm:$0xff]
    %v62 = vld [vmem:[#allocation3 + $0x48] sm:$0xff]
    %v63 = vld [vmem:[#allocation3 + $0x50] sm:$0xff]
    %v64 = vld [vmem:[#allocation3 + $0x58] sm:$0xff]
    %v65 = vld [vmem:[#allocation3 + $0x60] sm:$0xff]
    %v66 = vld [vmem:[#allocation3 + $0x68] sm:$0xff]
    %v67 = vld [vmem:[#allocation3 + $0x70] sm:$0xff]
    %v68 = vld [vmem:[#allocation3 + $0x78] sm:$0xff]
    %v69 = vld [vmem:[%s3] sm:$0x1]
    %v71 = vlaneseq
    %v72 = vshrl.u32 %v71, 7
    %v73 = vsub.s32 0, %v72
    %v74 = vrot.slane %v69, %v73
    %76 = vmatprep.subr.mxu0 0.0
    %77 = vmatpush1.msra.mxu0 %v53
    %78 = vmatprep.subr.mxu0 0.0
    %79 = vmatpush1.msra.mxu0 %v54
    %80 = vmatprep.subr.mxu0 0.0
    %81 = vmatpush1.msra.mxu0 %v55
    %82 = vmatprep.subr.mxu0 0.0
    %83 = vmatpush1.msra.mxu0 %v56
    %84 = vmatprep.subr.mxu0 0.0
    %85 = vmatpush1.msra.mxu0 %v57
    %86 = vmatprep.subr.mxu0 0.0
    %87 = vmatpush1.msra.mxu0 %v58
    %88 = vmatprep.subr.mxu0 0.0
    %89 = vmatpush1.msra.mxu0 %v59
    %90 = vmatprep.subr.mxu0 0.0
    %91 = vmatpush1.msra.mxu0 %v60
    %92 = vmatprep.subr.mxu0 0.0
    %93 = vmatpush1.msra.mxu0 %v61
    %94 = vmatprep.subr.mxu0 0.0
    %95 = vmatpush1.msra.mxu0 %v62
    %96 = vmatprep.subr.mxu0 0.0
    %97 = vmatpush1.msra.mxu0 %v63
    %98 = vmatprep.subr.mxu0 0.0
    %99 = vmatpush1.msra.mxu0 %v64
    %100 = vmatprep.subr.mxu0 0.0
    %101 = vmatpush1.msra.mxu0 %v65
    %102 = vmatprep.subr.mxu0 0.0
    %103 = vmatpush1.msra.mxu0 %v66
    %104 = vmatprep.subr.mxu0 0.0
    %105 = vmatpush1.msra.mxu0 %v67
    %106 = vmatprep.subr.mxu0 0.0
    %107 = vmatpush1.msra.mxu0 %v68
    %108 = vmatprep.subr.mxu0 0.0
    %109 = vmatpush1.msra.mxu0 0.0
    %110 = vmatprep.subr.mxu0 0.0
    %111 = vmatpush1.msra.mxu0 0.0
    %112 = vmatprep.subr.mxu0 0.0
    %113 = vmatpush1.msra.mxu0 0.0
    %114 = vmatprep.subr.mxu0 0.0
    %115 = vmatpush1.msra.mxu0 0.0
    %116 = vmatprep.subr.mxu0 0.0
    %117 = vmatpush1.msra.mxu0 0.0
    %118 = vmatprep.subr.mxu0 0.0
    %119 = vmatpush1.msra.mxu0 0.0
    %120 = vmatprep.subr.mxu0 0.0
    %121 = vmatpush1.msra.mxu0 0.0
    %122 = vmatprep.subr.mxu0 0.0
    %123 = vmatpush1.msra.mxu0 0.0
    %124 = vmatprep.subr.mxu0 0.0
    %125 = vmatpush1.msra.mxu0 0.0
    %126 = vmatprep.subr.mxu0 0.0
    %127 = vmatpush1.msra.mxu0 0.0
    %128 = vmatprep.subr.mxu0 0.0
    %129 = vmatpush1.msra.mxu0 0.0
    %130 = vmatprep.subr.mxu0 0.0
    %131 = vmatpush1.msra.mxu0 0.0
    %132 = vmatprep.subr.mxu0 0.0
    %133 = vmatpush1.msra.mxu0 0.0
    %134 = vmatprep.subr.mxu0 0.0
    %135 = vmatpush1.msra.mxu0 0.0
    %136 = vmatprep.subr.mxu0 0.0
    %137 = vmatpush1.msra.mxu0 0.0
    %138 = vmatprep.subr.mxu0 0.0
    %139 = vmatpush1.msra.mxu0 0.0
    %140 = vmatprep.mubr.f32.mxu0 0.0
    %141 = vmatmul.mubr.f32.gmra.mrb[0].mxu0 %v52
    %v142 = vpop.f32.mrb[0].mxu0
    %v143 = vadd.f32 %v74, %v142
    %v144 = vpop.f32.mrb[0].mxu0
    %145 = vdwg.mxu0
    %146 = vst [vmem:[#allocation2] sm:$0xff] %v143
    %v147 = vld [vmem:[%s2] sm:$0xff]
    %v148 = vld [vmem:[%s2 + $0x8] sm:$0xff]
    %v149 = vld [vmem:[%s2 + $0x10] sm:$0xff]
    %v150 = vld [vmem:[%s2 + $0x18] sm:$0xff]
    %v151 = vlaneseq
    %v152 = vand.u32 %v151, 127
    %vm153 = vcmp.ge.s32.totalorder %v152, 64
    %vm154 = vcmp.lt.s32.totalorder %v152, 96
    %vm155 = vmand %vm153, %vm154
    %v156 = vld [vmem:[#allocation2] sm:$0x1]
    %vm157 = vcmask 261120
    %v159 = vsel %vm157, 0.0, 0
    %161 = vmatprep.subr.mxu0 0.0
    %162 = vmatpush1.msra.mxu0 %v147
    %163 = vmatprep.subr.mxu0 0.0
    %164 = vmatpush1.msra.mxu0 %v148
    %165 = vmatprep.subr.mxu0 0.0
    %166 = vmatpush1.msra.mxu0 %v149
    %167 = vmatprep.subr.mxu0 0.0
    %168 = vmatpush1.msra.mxu0 %v150
    %169 = vmatprep.subr.mxu0 0.0
    %170 = vmatpush1.msra.mxu0 0.0
    %171 = vmatprep.subr.mxu0 0.0
    %172 = vmatpush1.msra.mxu0 0.0
    %173 = vmatprep.subr.mxu0 0.0
    %174 = vmatpush1.msra.mxu0 0.0
    %175 = vmatprep.subr.mxu0 0.0
    %176 = vmatpush1.msra.mxu0 0.0
    %177 = vmatprep.subr.mxu0 0.0
    %178 = vmatpush1.msra.mxu0 0.0
    %179 = vmatprep.subr.mxu0 0.0
    %180 = vmatpush1.msra.mxu0 0.0
    %181 = vmatprep.subr.mxu0 0.0
    %182 = vmatpush1.msra.mxu0 0.0
    %183 = vmatprep.subr.mxu0 0.0
    %184 = vmatpush1.msra.mxu0 0.0
    %185 = vmatprep.subr.mxu0 0.0
    %186 = vmatpush1.msra.mxu0 0.0
    %187 = vmatprep.subr.mxu0 0.0
    %188 = vmatpush1.msra.mxu0 0.0
    %189 = vmatprep.subr.mxu0 0.0
    %190 = vmatpush1.msra.mxu0 0.0
    %191 = vmatprep.subr.mxu0 0.0
    %192 = vmatpush1.msra.mxu0 0.0
    %193 = vmatprep.subr.mxu0 0.0
    %194 = vmatpush1.msra.mxu0 0.0
    %195 = vmatprep.subr.mxu0 0.0
    %196 = vmatpush1.msra.mxu0 0.0
    %197 = vmatprep.subr.mxu0 0.0
    %198 = vmatpush1.msra.mxu0 0.0
    %199 = vmatprep.subr.mxu0 0.0
    %200 = vmatpush1.msra.mxu0 0.0
    %201 = vmatprep.subr.mxu0 0.0
    %202 = vmatpush1.msra.mxu0 0.0
    %203 = vmatprep.subr.mxu0 0.0
    %204 = vmatpush1.msra.mxu0 0.0
    %205 = vmatprep.subr.mxu0 0.0
    %206 = vmatpush1.msra.mxu0 0.0
    %207 = vmatprep.subr.mxu0 0.0
    %208 = vmatpush1.msra.mxu0 0.0
    %209 = vmatprep.subr.mxu0 0.0
    %210 = vmatpush1.msra.mxu0 0.0
    %211 = vmatprep.subr.mxu0 0.0
    %212 = vmatpush1.msra.mxu0 0.0
    %213 = vmatprep.subr.mxu0 0.0
    %214 = vmatpush1.msra.mxu0 0.0
    %215 = vmatprep.subr.mxu0 0.0
    %216 = vmatpush1.msra.mxu0 0.0
    %217 = vmatprep.subr.mxu0 0.0
    %218 = vmatpush1.msra.mxu0 0.0
    %219 = vmatprep.subr.mxu0 0.0
    %220 = vmatpush1.msra.mxu0 0.0
    %221 = vmatprep.subr.mxu0 0.0
    %222 = vmatpush1.msra.mxu0 0.0
    %223 = vmatprep.subr.mxu0 0.0
    %224 = vmatpush1.msra.mxu0 0.0
    %225 = vmatprep.mubr.f32.mxu0 0.0
    %226 = vmatmul.mubr.f32.gmra.mrb[0].mxu0 %v159
    %v227 = vpop.f32.mrb[0].mxu0
    %v228 = vadd.f32 0.0, %v227
    %v229 = vpop.f32.mrb[0].mxu0
    %230 = vdwg.mxu0
    %v231 = vadd.f32 %v156, %v228
    %v232 = vtanh.pop %v231
    %v233 = vxor.u32 %v231, 2147483648
    %v234 = vmul.f32 %v233, 1.442695
    %v235 = vpow.pop %v234
    %v236 = vadd.f32 %v235, 1.0
    %v237 = vrcp.pop %v236
    %v238 = vmul.f32 1.0, %v237
    %v239 = vsel %vm155, %v232, %v238
    %240 = vrot.lane.b32.xlu0 %v239, 96
    %v241 = vpop.permute.xlu0 %240
    %242 = vrot.lane.b32.xlu0 %v239, 64
    %v243 = vpop.permute.xlu0 %242
    %244 = vrot.lane.b32.xlu0 %v239, 32
    %v245 = vpop.permute.xlu0 %244
    %v246 = vmul.f32 %v241, 0.0
    %v247 = vmul.f32 %v239, %v243
    %v248 = vadd.f32 %v246, %v247
    %v249 = vtanh.pop %v248
    %v250 = vmul.f32 %v245, %v249
    %v251 = vld [vmem:[#allocation2 + $0x1] sm:$0x1]
    %v253 = vsel %vm157, %v250, 0
    %255 = vmatprep.subr.mxu0 0.0
    %256 = vmatpush1.msra.mxu0 %v147
    %257 = vmatprep.subr.mxu0 0.0
    %258 = vmatpush1.msra.mxu0 %v148
    %259 = vmatprep.subr.mxu0 0.0
    %260 = vmatpush1.msra.mxu0 %v149
    %261 = vmatprep.subr.mxu0 0.0
    %262 = vmatpush1.msra.mxu0 %v150
    %263 = vmatprep.subr.mxu0 0.0
    %264 = vmatpush1.msra.mxu0 0.0
    %265 = vmatprep.subr.mxu0 0.0
    %266 = vmatpush1.msra.mxu0 0.0
    %267 = vmatprep.subr.mxu0 0.0
    %268 = vmatpush1.msra.mxu0 0.0
    %269 = vmatprep.subr.mxu0 0.0
    %270 = vmatpush1.msra.mxu0 0.0
    %271 = vmatprep.subr.mxu0 0.0
    %272 = vmatpush1.msra.mxu0 0.0
    %273 = vmatprep.subr.mxu0 0.0
    %274 = vmatpush1.msra.mxu0 0.0
    %275 = vmatprep.subr.mxu0 0.0
    %276 = vmatpush1.msra.mxu0 0.0
    %277 = vmatprep.subr.mxu0 0.0
    %278 = vmatpush1.msra.mxu0 0.0
    %279 = vmatprep.subr.mxu0 0.0
    %280 = vmatpush1.msra.mxu0 0.0
    %281 = vmatprep.subr.mxu0 0.0
    %282 = vmatpush1.msra.mxu0 0.0
    %283 = vmatprep.subr.mxu0 0.0
    %284 = vmatpush1.msra.mxu0 0.0
    %285 = vmatprep.subr.mxu0 0.0
    %286 = vmatpush1.msra.mxu0 0.0
    %287 = vmatprep.subr.mxu0 0.0
    %288 = vmatpush1.msra.mxu0 0.0
    %289 = vmatprep.subr.mxu0 0.0
    %290 = vmatpush1.msra.mxu0 0.0
    %291 = vmatprep.subr.mxu0 0.0
    %292 = vmatpush1.msra.mxu0 0.0
    %293 = vmatprep.subr.mxu0 0.0
    %294 = vmatpush1.msra.mxu0 0.0
    %295 = vmatprep.subr.mxu0 0.0
    %296 = vmatpush1.msra.mxu0 0.0
    %297 = vmatprep.subr.mxu0 0.0
    %298 = vmatpush1.msra.mxu0 0.0
    %299 = vmatprep.subr.mxu0 0.0
    %300 = vmatpush1.msra.mxu0 0.0
    %301 = vmatprep.subr.mxu0 0.0
    %302 = vmatpush1.msra.mxu0 0.0
    %303 = vmatprep.subr.mxu0 0.0
    %304 = vmatpush1.msra.mxu0 0.0
    %305 = vmatprep.subr.mxu0 0.0
    %306 = vmatpush1.msra.mxu0 0.0
    %307 = vmatprep.subr.mxu0 0.0
    %308 = vmatpush1.msra.mxu0 0.0
    %309 = vmatprep.subr.mxu0 0.0
    %310 = vmatpush1.msra.mxu0 0.0
    %311 = vmatprep.subr.mxu0 0.0
    %312 = vmatpush1.msra.mxu0 0.0
    %313 = vmatprep.subr.mxu0 0.0
    %314 = vmatpush1.msra.mxu0 0.0
    %315 = vmatprep.subr.mxu0 0.0
    %316 = vmatpush1.msra.mxu0 0.0
    %317 = vmatprep.subr.mxu0 0.0
    %318 = vmatpush1.msra.mxu0 0.0
    %319 = vmatprep.mubr.f32.mxu0 0.0
    %320 = vmatmul.mubr.f32.gmra.mrb[0].mxu0 %v253
    %v321 = vpop.f32.mrb[0].mxu0
    %v322 = vadd.f32 0.0, %v321
    %v323 = vpop.f32.mrb[0].mxu0
    %324 = vdwg.mxu0
    %v325 = vadd.f32 %v251, %v322
    %v326 = vtanh.pop %v325
    %v327 = vxor.u32 %v325, 2147483648
    %v328 = vmul.f32 %v327, 1.442695
    %v329 = vpow.pop %v328
    %v330 = vadd.f32 %v329, 1.0
    %v331 = vrcp.pop %v330
    %v332 = vmul.f32 1.0, %v331
    %v333 = vsel %vm155, %v326, %v332
    %334 = vrot.lane.b32.xlu0 %v333, 96
    %v335 = vpop.permute.xlu0 %334
    %336 = vrot.lane.b32.xlu0 %v333, 64
    %v337 = vpop.permute.xlu0 %336
    %338 = vrot.lane.b32.xlu0 %v333, 32
    %v339 = vpop.permute.xlu0 %338
    %v340 = vmul.f32 %v335, %v248
    %v341 = vmul.f32 %v333, %v337
    %v342 = vadd.f32 %v340, %v341
    %v343 = vtanh.pop %v342
    %v344 = vmul.f32 %v339, %v343
    %v345 = vld [vmem:[#allocation2 + $0x2] sm:$0x1]
    %v347 = vsel %vm157, %v344, 0
    %349 = vmatprep.subr.mxu0 0.0
    %350 = vmatpush1.msra.mxu0 %v147
    %351 = vmatprep.subr.mxu0 0.0
    %352 = vmatpush1.msra.mxu0 %v148
    %353 = vmatprep.subr.mxu0 0.0
    %354 = vmatpush1.msra.mxu0 %v149
    %355 = vmatprep.subr.mxu0 0.0
    %356 = vmatpush1.msra.mxu0 %v150
    %357 = vmatprep.subr.mxu0 0.0
    %358 = vmatpush1.msra.mxu0 0.0
    %359 = vmatprep.subr.mxu0 0.0
    %360 = vmatpush1.msra.mxu0 0.0
    %361 = vmatprep.subr.mxu0 0.0
    %362 = vmatpush1.msra.mxu0 0.0
    %363 = vmatprep.subr.mxu0 0.0
    %364 = vmatpush1.msra.mxu0 0.0
    %365 = vmatprep.subr.mxu0 0.0
    %366 = vmatpush1.msra.mxu0 0.0
    %367 = vmatprep.subr.mxu0 0.0
    %368 = vmatpush1.msra.mxu0 0.0
    %369 = vmatprep.subr.mxu0 0.0
    %370 = vmatpush1.msra.mxu0 0.0
    %371 = vmatprep.subr.mxu0 0.0
    %372 = vmatpush1.msra.mxu0 0.0
    %373 = vmatprep.subr.mxu0 0.0
    %374 = vmatpush1.msra.mxu0 0.0
    %375 = vmatprep.subr.mxu0 0.0
    %376 = vmatpush1.msra.mxu0 0.0
    %377 = vmatprep.subr.mxu0 0.0
    %378 = vmatpush1.msra.mxu0 0.0
    %379 = vmatprep.subr.mxu0 0.0
    %380 = vmatpush1.msra.mxu0 0.0
    %381 = vmatprep.subr.mxu0 0.0
    %382 = vmatpush1.msra.mxu0 0.0
    %383 = vmatprep.subr.mxu0 0.0
    %384 = vmatpush1.msra.mxu0 0.0
    %385 = vmatprep.subr.mxu0 0.0
    %386 = vmatpush1.msra.mxu0 0.0
    %387 = vmatprep.subr.mxu0 0.0
    %388 = vmatpush1.msra.mxu0 0.0
    %389 = vmatprep.subr.mxu0 0.0
    %390 = vmatpush1.msra.mxu0 0.0
    %391 = vmatprep.subr.mxu0 0.0
    %392 = vmatpush1.msra.mxu0 0.0
    %393 = vmatprep.subr.mxu0 0.0
    %394 = vmatpush1.msra.mxu0 0.0
    %395 = vmatprep.subr.mxu0 0.0
    %396 = vmatpush1.msra.mxu0 0.0
    %397 = vmatprep.subr.mxu0 0.0
    %398 = vmatpush1.msra.mxu0 0.0
    %399 = vmatprep.subr.mxu0 0.0
    %400 = vmatpush1.msra.mxu0 0.0
    %401 = vmatprep.subr.mxu0 0.0
    %402 = vmatpush1.msra.mxu0 0.0
    %403 = vmatprep.subr.mxu0 0.0
    %404 = vmatpush1.msra.mxu0 0.0
    %405 = vmatprep.subr.mxu0 0.0
    %406 = vmatpush1.msra.mxu0 0.0
    %407 = vmatprep.subr.mxu0 0.0
    %408 = vmatpush1.msra.mxu0 0.0
    %409 = vmatprep.subr.mxu0 0.0
    %410 = vmatpush1.msra.mxu0 0.0
    %411 = vmatprep.subr.mxu0 0.0
    %412 = vmatpush1.msra.mxu0 0.0
    %413 = vmatprep.mubr.f32.mxu0 0.0
    %414 = vmatmul.mubr.f32.gmra.mrb[0].mxu0 %v347
    %v415 = vpop.f32.mrb[0].mxu0
    %v416 = vadd.f32 0.0, %v415
    %v417 = vpop.f32.mrb[0].mxu0
    %418 = vdwg.mxu0
    %v419 = vadd.f32 %v345, %v416
    %v420 = vtanh.pop %v419
    %v421 = vxor.u32 %v419, 2147483648
    %v422 = vmul.f32 %v421, 1.442695
    %v423 = vpow.pop %v422
    %v424 = vadd.f32 %v423, 1.0
    %v425 = vrcp.pop %v424
    %v426 = vmul.f32 1.0, %v425
    %v427 = vsel %vm155, %v420, %v426
    %428 = vrot.lane.b32.xlu0 %v427, 96
    %v429 = vpop.permute.xlu0 %428
    %430 = vrot.lane.b32.xlu0 %v427, 64
    %v431 = vpop.permute.xlu0 %430
    %432 = vrot.lane.b32.xlu0 %v427, 32
    %v433 = vpop.permute.xlu0 %432
    %v434 = vmul.f32 %v429, %v342
    %v435 = vmul.f32 %v427, %v431
    %v436 = vadd.f32 %v434, %v435
    %v437 = vtanh.pop %v436
    %v438 = vmul.f32 %v433, %v437
    %v439 = vld [vmem:[#allocation2 + $0x3] sm:$0x1]
    %v441 = vsel %vm157, %v438, 0
    %443 = vmatprep.subr.mxu0 0.0
    %444 = vmatpush1.msra.mxu0 %v147
    %445 = vmatprep.subr.mxu0 0.0
    %446 = vmatpush1.msra.mxu0 %v148
    %447 = vmatprep.subr.mxu0 0.0
    %448 = vmatpush1.msra.mxu0 %v149
    %449 = vmatprep.subr.mxu0 0.0
    %450 = vmatpush1.msra.mxu0 %v150
    %451 = vmatprep.subr.mxu0 0.0
    %452 = vmatpush1.msra.mxu0 0.0
    %453 = vmatprep.subr.mxu0 0.0
    %454 = vmatpush1.msra.mxu0 0.0
    %455 = vmatprep.subr.mxu0 0.0
    %456 = vmatpush1.msra.mxu0 0.0
    %457 = vmatprep.subr.mxu0 0.0
    %458 = vmatpush1.msra.mxu0 0.0
    %459 = vmatprep.subr.mxu0 0.0
    %460 = vmatpush1.msra.mxu0 0.0
    %461 = vmatprep.subr.mxu0 0.0
    %462 = vmatpush1.msra.mxu0 0.0
    %463 = vmatprep.subr.mxu0 0.0
    %464 = vmatpush1.msra.mxu0 0.0
    %465 = vmatprep.subr.mxu0 0.0
    %466 = vmatpush1.msra.mxu0 0.0
    %467 = vmatprep.subr.mxu0 0.0
    %468 = vmatpush1.msra.mxu0 0.0
    %469 = vmatprep.subr.mxu0 0.0
    %470 = vmatpush1.msra.mxu0 0.0
    %471 = vmatprep.subr.mxu0 0.0
    %472 = vmatpush1.msra.mxu0 0.0
    %473 = vmatprep.subr.mxu0 0.0
    %474 = vmatpush1.msra.mxu0 0.0
    %475 = vmatprep.subr.mxu0 0.0
    %476 = vmatpush1.msra.mxu0 0.0
    %477 = vmatprep.subr.mxu0 0.0
    %478 = vmatpush1.msra.mxu0 0.0
    %479 = vmatprep.subr.mxu0 0.0
    %480 = vmatpush1.msra.mxu0 0.0
    %481 = vmatprep.subr.mxu0 0.0
    %482 = vmatpush1.msra.mxu0 0.0
    %483 = vmatprep.subr.mxu0 0.0
    %484 = vmatpush1.msra.mxu0 0.0
    %485 = vmatprep.subr.mxu0 0.0
    %486 = vmatpush1.msra.mxu0 0.0
    %487 = vmatprep.subr.mxu0 0.0
    %488 = vmatpush1.msra.mxu0 0.0
    %489 = vmatprep.subr.mxu0 0.0
    %490 = vmatpush1.msra.mxu0 0.0
    %491 = vmatprep.subr.mxu0 0.0
    %492 = vmatpush1.msra.mxu0 0.0
    %493 = vmatprep.subr.mxu0 0.0
    %494 = vmatpush1.msra.mxu0 0.0
    %495 = vmatprep.subr.mxu0 0.0
    %496 = vmatpush1.msra.mxu0 0.0
    %497 = vmatprep.subr.mxu0 0.0
    %498 = vmatpush1.msra.mxu0 0.0
    %499 = vmatprep.subr.mxu0 0.0
    %500 = vmatpush1.msra.mxu0 0.0
    %501 = vmatprep.subr.mxu0 0.0
    %502 = vmatpush1.msra.mxu0 0.0
    %503 = vmatprep.subr.mxu0 0.0
    %504 = vmatpush1.msra.mxu0 0.0
    %505 = vmatprep.subr.mxu0 0.0
    %506 = vmatpush1.msra.mxu0 0.0
    %507 = vmatprep.mubr.f32.mxu0 0.0
    %508 = vmatmul.mubr.f32.gmra.mrb[0].mxu0 %v441
    %v509 = vpop.f32.mrb[0].mxu0
    %v510 = vadd.f32 0.0, %v509
    %v511 = vpop.f32.mrb[0].mxu0
    %512 = vdwg.mxu0
    %v513 = vadd.f32 %v439, %v510
    %v514 = vtanh.pop %v513
    %v515 = vxor.u32 %v513, 2147483648
    %v516 = vmul.f32 %v515, 1.442695
    %v517 = vpow.pop %v516
    %v518 = vadd.f32 %v517, 1.0
    %v519 = vrcp.pop %v518
    %v520 = vmul.f32 1.0, %v519
    %v521 = vsel %vm155, %v514, %v520
    %522 = vrot.lane.b32.xlu0 %v521, 96
    %v523 = vpop.permute.xlu0 %522
    %524 = vrot.lane.b32.xlu0 %v521, 64
    %v525 = vpop.permute.xlu0 %524
    %526 = vrot.lane.b32.xlu0 %v521, 32
    %v527 = vpop.permute.xlu0 %526
    %v528 = vmul.f32 %v523, %v436
    %v529 = vmul.f32 %v521, %v525
    %v530 = vadd.f32 %v528, %v529
    %v531 = vtanh.pop %v530
    %v532 = vmul.f32 %v527, %v531
    %v533 = vld [vmem:[#allocation2 + $0x4] sm:$0x1]
    %v535 = vsel %vm157, %v532, 0
    %537 = vmatprep.subr.mxu0 0.0
    %538 = vmatpush1.msra.mxu0 %v147
    %539 = vmatprep.subr.mxu0 0.0
    %540 = vmatpush1.msra.mxu0 %v148
    %541 = vmatprep.subr.mxu0 0.0
    %542 = vmatpush1.msra.mxu0 %v149
    %543 = vmatprep.subr.mxu0 0.0
    %544 = vmatpush1.msra.mxu0 %v150
    %545 = vmatprep.subr.mxu0 0.0
    %546 = vmatpush1.msra.mxu0 0.0
    %547 = vmatprep.subr.mxu0 0.0
    %548 = vmatpush1.msra.mxu0 0.0
    %549 = vmatprep.subr.mxu0 0.0
    %550 = vmatpush1.msra.mxu0 0.0
    %551 = vmatprep.subr.mxu0 0.0
    %552 = vmatpush1.msra.mxu0 0.0
    %553 = vmatprep.subr.mxu0 0.0
    %554 = vmatpush1.msra.mxu0 0.0
    %555 = vmatprep.subr.mxu0 0.0
    %556 = vmatpush1.msra.mxu0 0.0
    %557 = vmatprep.subr.mxu0 0.0
    %558 = vmatpush1.msra.mxu0 0.0
    %559 = vmatprep.subr.mxu0 0.0
    %560 = vmatpush1.msra.mxu0 0.0
    %561 = vmatprep.subr.mxu0 0.0
    %562 = vmatpush1.msra.mxu0 0.0
    %563 = vmatprep.subr.mxu0 0.0
    %564 = vmatpush1.msra.mxu0 0.0
    %565 = vmatprep.subr.mxu0 0.0
    %566 = vmatpush1.msra.mxu0 0.0
    %567 = vmatprep.subr.mxu0 0.0
    %568 = vmatpush1.msra.mxu0 0.0
    %569 = vmatprep.subr.mxu0 0.0
    %570 = vmatpush1.msra.mxu0 0.0
    %571 = vmatprep.subr.mxu0 0.0
    %572 = vmatpush1.msra.mxu0 0.0
    %573 = vmatprep.subr.mxu0 0.0
    %574 = vmatpush1.msra.mxu0 0.0
    %575 = vmatprep.subr.mxu0 0.0
    %576 = vmatpush1.msra.mxu0 0.0
    %577 = vmatprep.subr.mxu0 0.0
    %578 = vmatpush1.msra.mxu0 0.0
    %579 = vmatprep.subr.mxu0 0.0
    %580 = vmatpush1.msra.mxu0 0.0
    %581 = vmatprep.subr.mxu0 0.0
    %582 = vmatpush1.msra.mxu0 0.0
    %583 = vmatprep.subr.mxu0 0.0
    %584 = vmatpush1.msra.mxu0 0.0
    %585 = vmatprep.subr.mxu0 0.0
    %586 = vmatpush1.msra.mxu0 0.0
    %587 = vmatprep.subr.mxu0 0.0
    %588 = vmatpush1.msra.mxu0 0.0
    %589 = vmatprep.subr.mxu0 0.0
    %590 = vmatpush1.msra.mxu0 0.0
    %591 = vmatprep.subr.mxu0 0.0
    %592 = vmatpush1.msra.mxu0 0.0
    %593 = vmatprep.subr.mxu0 0.0
    %594 = vmatpush1.msra.mxu0 0.0
    %595 = vmatprep.subr.mxu0 0.0
    %596 = vmatpush1.msra.mxu0 0.0
    %597 = vmatprep.subr.mxu0 0.0
    %598 = vmatpush1.msra.mxu0 0.0
    %599 = vmatprep.subr.mxu0 0.0
    %600 = vmatpush1.msra.mxu0 0.0
    %601 = vmatprep.mubr.f32.mxu0 0.0
    %602 = vmatmul.mubr.f32.gmra.mrb[0].mxu0 %v535
    %v603 = vpop.f32.mrb[0].mxu0
    %v604 = vadd.f32 0.0, %v603
    %v605 = vpop.f32.mrb[0].mxu0
    %606 = vdwg.mxu0
    %v607 = vadd.f32 %v533, %v604
    %v608 = vtanh.pop %v607
    %v609 = vxor.u32 %v607, 2147483648
    %v610 = vmul.f32 %v609, 1.442695
    %v611 = vpow.pop %v610
    %v612 = vadd.f32 %v611, 1.0
    %v613 = vrcp.pop %v612
    %v614 = vmul.f32 1.0, %v613
    %v615 = vsel %vm155, %v608, %v614
    %616 = vrot.lane.b32.xlu0 %v615, 96
    %v617 = vpop.permute.xlu0 %616
    %618 = vrot.lane.b32.xlu0 %v615, 64
    %v619 = vpop.permute.xlu0 %618
    %620 = vrot.lane.b32.xlu0 %v615, 32
    %v621 = vpop.permute.xlu0 %620
    %v622 = vmul.f32 %v617, %v530
    %v623 = vmul.f32 %v615, %v619
    %v624 = vadd.f32 %v622, %v623
    %v625 = vtanh.pop %v624
    %v626 = vmul.f32 %v621, %v625
    %v627 = vld [vmem:[#allocation2 + $0x5] sm:$0x1]
    %v629 = vsel %vm157, %v626, 0
    %631 = vmatprep.subr.mxu0 0.0
    %632 = vmatpush1.msra.mxu0 %v147
    %633 = vmatprep.subr.mxu0 0.0
    %634 = vmatpush1.msra.mxu0 %v148
    %635 = vmatprep.subr.mxu0 0.0
    %636 = vmatpush1.msra.mxu0 %v149
    %637 = vmatprep.subr.mxu0 0.0
    %638 = vmatpush1.msra.mxu0 %v150
    %639 = vmatprep.subr.mxu0 0.0
    %640 = vmatpush1.msra.mxu0 0.0
    %641 = vmatprep.subr.mxu0 0.0
    %642 = vmatpush1.msra.mxu0 0.0
    %643 = vmatprep.subr.mxu0 0.0
    %644 = vmatpush1.msra.mxu0 0.0
    %645 = vmatprep.subr.mxu0 0.0
    %646 = vmatpush1.msra.mxu0 0.0
    %647 = vmatprep.subr.mxu0 0.0
    %648 = vmatpush1.msra.mxu0 0.0
    %649 = vmatprep.subr.mxu0 0.0
    %650 = vmatpush1.msra.mxu0 0.0
    %651 = vmatprep.subr.mxu0 0.0
    %652 = vmatpush1.msra.mxu0 0.0
    %653 = vmatprep.subr.mxu0 0.0
    %654 = vmatpush1.msra.mxu0 0.0
    %655 = vmatprep.subr.mxu0 0.0
    %656 = vmatpush1.msra.mxu0 0.0
    %657 = vmatprep.subr.mxu0 0.0
    %658 = vmatpush1.msra.mxu0 0.0
    %659 = vmatprep.subr.mxu0 0.0
    %660 = vmatpush1.msra.mxu0 0.0
    %661 = vmatprep.subr.mxu0 0.0
    %662 = vmatpush1.msra.mxu0 0.0
    %663 = vmatprep.subr.mxu0 0.0
    %664 = vmatpush1.msra.mxu0 0.0
    %665 = vmatprep.subr.mxu0 0.0
    %666 = vmatpush1.msra.mxu0 0.0
    %667 = vmatprep.subr.mxu0 0.0
    %668 = vmatpush1.msra.mxu0 0.0
    %669 = vmatprep.subr.mxu0 0.0
    %670 = vmatpush1.msra.mxu0 0.0
    %671 = vmatprep.subr.mxu0 0.0
    %672 = vmatpush1.msra.mxu0 0.0
    %673 = vmatprep.subr.mxu0 0.0
    %674 = vmatpush1.msra.mxu0 0.0
    %675 = vmatprep.subr.mxu0 0.0
    %676 = vmatpush1.msra.mxu0 0.0
    %677 = vmatprep.subr.mxu0 0.0
    %678 = vmatpush1.msra.mxu0 0.0
    %679 = vmatprep.subr.mxu0 0.0
    %680 = vmatpush1.msra.mxu0 0.0
    %681 = vmatprep.subr.mxu0 0.0
    %682 = vmatpush1.msra.mxu0 0.0
    %683 = vmatprep.subr.mxu0 0.0
    %684 = vmatpush1.msra.mxu0 0.0
    %685 = vmatprep.subr.mxu0 0.0
    %686 = vmatpush1.msra.mxu0 0.0
    %687 = vmatprep.subr.mxu0 0.0
    %688 = vmatpush1.msra.mxu0 0.0
    %689 = vmatprep.subr.mxu0 0.0
    %690 = vmatpush1.msra.mxu0 0.0
    %691 = vmatprep.subr.mxu0 0.0
    %692 = vmatpush1.msra.mxu0 0.0
    %693 = vmatprep.subr.mxu0 0.0
    %694 = vmatpush1.msra.mxu0 0.0
    %695 = vmatprep.mubr.f32.mxu0 0.0
    %696 = vmatmul.mubr.f32.gmra.mrb[0].mxu0 %v629
    %v697 = vpop.f32.mrb[0].mxu0
    %v698 = vadd.f32 0.0, %v697
    %v699 = vpop.f32.mrb[0].mxu0
    %700 = vdwg.mxu0
    %v701 = vadd.f32 %v627, %v698
    %v702 = vtanh.pop %v701
    %v703 = vxor.u32 %v701, 2147483648
    %v704 = vmul.f32 %v703, 1.442695
    %v705 = vpow.pop %v704
    %v706 = vadd.f32 %v705, 1.0
    %v707 = vrcp.pop %v706
    %v708 = vmul.f32 1.0, %v707
    %v709 = vsel %vm155, %v702, %v708
    %710 = vrot.lane.b32.xlu0 %v709, 96
    %v711 = vpop.permute.xlu0 %710
    %712 = vrot.lane.b32.xlu0 %v709, 64
    %v713 = vpop.permute.xlu0 %712
    %714 = vrot.lane.b32.xlu0 %v709, 32
    %v715 = vpop.permute.xlu0 %714
    %v716 = vmul.f32 %v711, %v624
    %v717 = vmul.f32 %v709, %v713
    %v718 = vadd.f32 %v716, %v717
    %v719 = vtanh.pop %v718
    %v720 = vmul.f32 %v715, %v719
    %v721 = vld [vmem:[#allocation2 + $0x6] sm:$0x1]
    %v723 = vsel %vm157, %v720, 0
    %725 = vmatprep.subr.mxu0 0.0
    %726 = vmatpush1.msra.mxu0 %v147
    %727 = vmatprep.subr.mxu0 0.0
    %728 = vmatpush1.msra.mxu0 %v148
    %729 = vmatprep.subr.mxu0 0.0
    %730 = vmatpush1.msra.mxu0 %v149
    %731 = vmatprep.subr.mxu0 0.0
    %732 = vmatpush1.msra.mxu0 %v150
    %733 = vmatprep.subr.mxu0 0.0
    %734 = vmatpush1.msra.mxu0 0.0
    %735 = vmatprep.subr.mxu0 0.0
    %736 = vmatpush1.msra.mxu0 0.0
    %737 = vmatprep.subr.mxu0 0.0
    %738 = vmatpush1.msra.mxu0 0.0
    %739 = vmatprep.subr.mxu0 0.0
    %740 = vmatpush1.msra.mxu0 0.0
    %741 = vmatprep.subr.mxu0 0.0
    %742 = vmatpush1.msra.mxu0 0.0
    %743 = vmatprep.subr.mxu0 0.0
    %744 = vmatpush1.msra.mxu0 0.0
    %745 = vmatprep.subr.mxu0 0.0
    %746 = vmatpush1.msra.mxu0 0.0
    %747 = vmatprep.subr.mxu0 0.0
    %748 = vmatpush1.msra.mxu0 0.0
    %749 = vmatprep.subr.mxu0 0.0
    %750 = vmatpush1.msra.mxu0 0.0
    %751 = vmatprep.subr.mxu0 0.0
    %752 = vmatpush1.msra.mxu0 0.0
    %753 = vmatprep.subr.mxu0 0.0
    %754 = vmatpush1.msra.mxu0 0.0
    %755 = vmatprep.subr.mxu0 0.0
    %756 = vmatpush1.msra.mxu0 0.0
    %757 = vmatprep.subr.mxu0 0.0
    %758 = vmatpush1.msra.mxu0 0.0
    %759 = vmatprep.subr.mxu0 0.0
    %760 = vmatpush1.msra.mxu0 0.0
    %761 = vmatprep.subr.mxu0 0.0
    %762 = vmatpush1.msra.mxu0 0.0
    %763 = vmatprep.subr.mxu0 0.0
    %764 = vmatpush1.msra.mxu0 0.0
    %765 = vmatprep.subr.mxu0 0.0
    %766 = vmatpush1.msra.mxu0 0.0
    %767 = vmatprep.subr.mxu0 0.0
    %768 = vmatpush1.msra.mxu0 0.0
    %769 = vmatprep.subr.mxu0 0.0
    %770 = vmatpush1.msra.mxu0 0.0
    %771 = vmatprep.subr.mxu0 0.0
    %772 = vmatpush1.msra.mxu0 0.0
    %773 = vmatprep.subr.mxu0 0.0
    %774 = vmatpush1.msra.mxu0 0.0
    %775 = vmatprep.subr.mxu0 0.0
    %776 = vmatpush1.msra.mxu0 0.0
    %777 = vmatprep.subr.mxu0 0.0
    %778 = vmatpush1.msra.mxu0 0.0
    %779 = vmatprep.subr.mxu0 0.0
    %780 = vmatpush1.msra.mxu0 0.0
    %781 = vmatprep.subr.mxu0 0.0
    %782 = vmatpush1.msra.mxu0 0.0
    %783 = vmatprep.subr.mxu0 0.0
    %784 = vmatpush1.msra.mxu0 0.0
    %785 = vmatprep.subr.mxu0 0.0
    %786 = vmatpush1.msra.mxu0 0.0
    %787 = vmatprep.subr.mxu0 0.0
    %788 = vmatpush1.msra.mxu0 0.0
    %789 = vmatprep.mubr.f32.mxu0 0.0
    %790 = vmatmul.mubr.f32.gmra.mrb[0].mxu0 %v723
    %v791 = vpop.f32.mrb[0].mxu0
    %v792 = vadd.f32 0.0, %v791
    %v793 = vpop.f32.mrb[0].mxu0
    %794 = vdwg.mxu0
    %v795 = vadd.f32 %v721, %v792
    %v796 = vtanh.pop %v795
    %v797 = vxor.u32 %v795, 2147483648
    %v798 = vmul.f32 %v797, 1.442695
    %v799 = vpow.pop %v798
    %v800 = vadd.f32 %v799, 1.0
    %v801 = vrcp.pop %v800
    %v802 = vmul.f32 1.0, %v801
    %v803 = vsel %vm155, %v796, %v802
    %804 = vrot.lane.b32.xlu0 %v803, 96
    %v805 = vpop.permute.xlu0 %804
    %806 = vrot.lane.b32.xlu0 %v803, 64
    %v807 = vpop.permute.xlu0 %806
    %808 = vrot.lane.b32.xlu0 %v803, 32
    %v809 = vpop.permute.xlu0 %808
    %v810 = vmul.f32 %v805, %v718
    %v811 = vmul.f32 %v803, %v807
    %v812 = vadd.f32 %v810, %v811
    %v813 = vtanh.pop %v812
    %v814 = vmul.f32 %v809, %v813
    %v815 = vld [vmem:[#allocation2 + $0x7] sm:$0x1]
    %v817 = vsel %vm157, %v814, 0
    %819 = vmatprep.subr.mxu0 0.0
    %820 = vmatpush1.msra.mxu0 %v147
    %821 = vmatprep.subr.mxu0 0.0
    %822 = vmatpush1.msra.mxu0 %v148
    %823 = vmatprep.subr.mxu0 0.0
    %824 = vmatpush1.msra.mxu0 %v149
    %825 = vmatprep.subr.mxu0 0.0
    %826 = vmatpush1.msra.mxu0 %v150
    %827 = vmatprep.subr.mxu0 0.0
    %828 = vmatpush1.msra.mxu0 0.0
    %829 = vmatprep.subr.mxu0 0.0
    %830 = vmatpush1.msra.mxu0 0.0
    %831 = vmatprep.subr.mxu0 0.0
    %832 = vmatpush1.msra.mxu0 0.0
    %833 = vmatprep.subr.mxu0 0.0
    %834 = vmatpush1.msra.mxu0 0.0
    %835 = vmatprep.subr.mxu0 0.0
    %836 = vmatpush1.msra.mxu0 0.0
    %837 = vmatprep.subr.mxu0 0.0
    %838 = vmatpush1.msra.mxu0 0.0
    %839 = vmatprep.subr.mxu0 0.0
    %840 = vmatpush1.msra.mxu0 0.0
    %841 = vmatprep.subr.mxu0 0.0
    %842 = vmatpush1.msra.mxu0 0.0
    %843 = vmatprep.subr.mxu0 0.0
    %844 = vmatpush1.msra.mxu0 0.0
    %845 = vmatprep.subr.mxu0 0.0
    %846 = vmatpush1.msra.mxu0 0.0
    %847 = vmatprep.subr.mxu0 0.0
    %848 = vmatpush1.msra.mxu0 0.0
    %849 = vmatprep.subr.mxu0 0.0
    %850 = vmatpush1.msra.mxu0 0.0
    %851 = vmatprep.subr.mxu0 0.0
    %852 = vmatpush1.msra.mxu0 0.0
    %853 = vmatprep.subr.mxu0 0.0
    %854 = vmatpush1.msra.mxu0 0.0
    %855 = vmatprep.subr.mxu0 0.0
    %856 = vmatpush1.msra.mxu0 0.0
    %857 = vmatprep.subr.mxu0 0.0
    %858 = vmatpush1.msra.mxu0 0.0
    %859 = vmatprep.subr.mxu0 0.0
    %860 = vmatpush1.msra.mxu0 0.0
    %861 = vmatprep.subr.mxu0 0.0
    %862 = vmatpush1.msra.mxu0 0.0
    %863 = vmatprep.subr.mxu0 0.0
    %864 = vmatpush1.msra.mxu0 0.0
    %865 = vmatprep.subr.mxu0 0.0
    %866 = vmatpush1.msra.mxu0 0.0
    %867 = vmatprep.subr.mxu0 0.0
    %868 = vmatpush1.msra.mxu0 0.0
    %869 = vmatprep.subr.mxu0 0.0
    %870 = vmatpush1.msra.mxu0 0.0
    %871 = vmatprep.subr.mxu0 0.0
    %872 = vmatpush1.msra.mxu0 0.0
    %873 = vmatprep.subr.mxu0 0.0
    %874 = vmatpush1.msra.mxu0 0.0
    %875 = vmatprep.subr.mxu0 0.0
    %876 = vmatpush1.msra.mxu0 0.0
    %877 = vmatprep.subr.mxu0 0.0
    %878 = vmatpush1.msra.mxu0 0.0
    %879 = vmatprep.subr.mxu0 0.0
    %880 = vmatpush1.msra.mxu0 0.0
    %881 = vmatprep.subr.mxu0 0.0
    %882 = vmatpush1.msra.mxu0 0.0
    %883 = vmatprep.mubr.f32.mxu0 0.0
    %884 = vmatmul.mubr.f32.gmra.mrb[0].mxu0 %v817
    %v885 = vpop.f32.mrb[0].mxu0
    %v886 = vadd.f32 0.0, %v885
    %v887 = vpop.f32.mrb[0].mxu0
    %888 = vdwg.mxu0
    %v889 = vadd.f32 %v815, %v886
    %v890 = vtanh.pop %v889
    %v891 = vxor.u32 %v889, 2147483648
    %v892 = vmul.f32 %v891, 1.442695
    %v893 = vpow.pop %v892
    %v894 = vadd.f32 %v893, 1.0
    %v895 = vrcp.pop %v894
    %v896 = vmul.f32 1.0, %v895
    %v897 = vsel %vm155, %v890, %v896
    %898 = vrot.lane.b32.xlu0 %v897, 96
    %v899 = vpop.permute.xlu0 %898
    %900 = vrot.lane.b32.xlu0 %v897, 64
    %v901 = vpop.permute.xlu0 %900
    %902 = vrot.lane.b32.xlu0 %v897, 32
    %v903 = vpop.permute.xlu0 %902
    %v904 = vmul.f32 %v899, %v812
    %v905 = vmul.f32 %v897, %v901
    %v906 = vadd.f32 %v904, %v905
    %v907 = vtanh.pop %v906
    %v908 = vmul.f32 %v903, %v907
    %v909 = vld [vmem:[#allocation6] sm:$0xff]
    %v910 = vld [vmem:[#allocation6 + $0x8] sm:$0xff]
    %v911 = vld [vmem:[#allocation6 + $0x10] sm:$0xff]
    %v912 = vld [vmem:[#allocation6 + $0x18] sm:$0xff]
    %v913 = vld [vmem:[%s5] sm:$0x1]
    %v915 = vsel %vm157, %v908, 0
    %917 = vmatprep.subr.mxu0 0.0
    %918 = vmatpush1.msra.mxu0 %v909
    %919 = vmatprep.subr.mxu0 0.0
    %920 = vmatpush1.msra.mxu0 %v910
    %921 = vmatprep.subr.mxu0 0.0
    %922 = vmatpush1.msra.mxu0 %v911
    %923 = vmatprep.subr.mxu0 0.0
    %924 = vmatpush1.msra.mxu0 %v912
    %925 = vmatprep.subr.mxu0 0.0
    %926 = vmatpush1.msra.mxu0 0.0
    %927 = vmatprep.subr.mxu0 0.0
    %928 = vmatpush1.msra.mxu0 0.0
    %929 = vmatprep.subr.mxu0 0.0
    %930 = vmatpush1.msra.mxu0 0.0
    %931 = vmatprep.subr.mxu0 0.0
    %932 = vmatpush1.msra.mxu0 0.0
    %933 = vmatprep.subr.mxu0 0.0
    %934 = vmatpush1.msra.mxu0 0.0
    %935 = vmatprep.subr.mxu0 0.0
    %936 = vmatpush1.msra.mxu0 0.0
    %937 = vmatprep.subr.mxu0 0.0
    %938 = vmatpush1.msra.mxu0 0.0
    %939 = vmatprep.subr.mxu0 0.0
    %940 = vmatpush1.msra.mxu0 0.0
    %941 = vmatprep.subr.mxu0 0.0
    %942 = vmatpush1.msra.mxu0 0.0
    %943 = vmatprep.subr.mxu0 0.0
    %944 = vmatpush1.msra.mxu0 0.0
    %945 = vmatprep.subr.mxu0 0.0
    %946 = vmatpush1.msra.mxu0 0.0
    %947 = vmatprep.subr.mxu0 0.0
    %948 = vmatpush1.msra.mxu0 0.0
    %949 = vmatprep.subr.mxu0 0.0
    %950 = vmatpush1.msra.mxu0 0.0
    %951 = vmatprep.subr.mxu0 0.0
    %952 = vmatpush1.msra.mxu0 0.0
    %953 = vmatprep.subr.mxu0 0.0
    %954 = vmatpush1.msra.mxu0 0.0
    %955 = vmatprep.subr.mxu0 0.0
    %956 = vmatpush1.msra.mxu0 0.0
    %957 = vmatprep.subr.mxu0 0.0
    %958 = vmatpush1.msra.mxu0 0.0
    %959 = vmatprep.subr.mxu0 0.0
    %960 = vmatpush1.msra.mxu0 0.0
    %961 = vmatprep.subr.mxu0 0.0
    %962 = vmatpush1.msra.mxu0 0.0
    %963 = vmatprep.subr.mxu0 0.0
    %964 = vmatpush1.msra.mxu0 0.0
    %965 = vmatprep.subr.mxu0 0.0
    %966 = vmatpush1.msra.mxu0 0.0
    %967 = vmatprep.subr.mxu0 0.0
    %968 = vmatpush1.msra.mxu0 0.0
    %969 = vmatprep.subr.mxu0 0.0
    %970 = vmatpush1.msra.mxu0 0.0
    %971 = vmatprep.subr.mxu0 0.0
    %972 = vmatpush1.msra.mxu0 0.0
    %973 = vmatprep.subr.mxu0 0.0
    %974 = vmatpush1.msra.mxu0 0.0
    %975 = vmatprep.subr.mxu0 0.0
    %976 = vmatpush1.msra.mxu0 0.0
    %977 = vmatprep.subr.mxu0 0.0
    %978 = vmatpush1.msra.mxu0 0.0
    %979 = vmatprep.subr.mxu0 0.0
    %980 = vmatpush1.msra.mxu0 0.0
    %981 = vmatprep.mubr.f32.mxu0 0.0
    %982 = vmatmul.mubr.f32.gmra.mrb[0].mxu0 %v915
    %v983 = vpop.f32.mrb[0].mxu0
    %v984 = vadd.f32 %v913, %v983
    %v985 = vpop.f32.mrb[0].mxu0
    %986 = vdwg.mxu0
    %987 = vst [vmem:[#allocation8] sm:$0x1] %v984
    // Predicated region
    $region34: #{_forward_jit.1} parent=1 // pred_check
      _
    $region35: #{_forward_jit.1} parent=1 // pred_check_branch
      %989 = sbr.rel (0) target = $region37
    $region36: #{_forward_jit.1} parent=1 // pred_region
      %s991 = ssub.s32 16, 16
      %992 = vsyncadd [#allocation5], %s991
      %s994 = sshll.u32 [#allocation8], 4
      %s995 = int_to_ptr.vmem [resolvable:$true] %s994
      %997 = dma.vmem_to_hbm [thread:$0]  %s995, 16, %s6, [#allocation5]
    $region37: #{_forward_jit.1} parent=1 // pred_fallthru
      _
    // Predicated region
    $region38: #{_forward_jit.1} parent=1 // pred_check
      _
    $region39: #{_forward_jit.1} parent=1 // pred_check_branch
      %999 = sbr.rel (0) target = $region41
    $region40: #{_forward_jit.1} parent=1 // pred_region
      %1000 = dma.done [#allocation5], 16
    $region41: #{_forward_jit.1} parent=1 // pred_fallthru
      _
    %1001 = vsyncpa [#allocation4], 1
    %1002 = vsyncpa [#allocation7], 1
    %1003 = vsyncpa [#allocation5], 1

</llo_original>
